<compile_context>
chip_gen: v6e
topology: v6e:2x2x1
jax: 0.10.0
libtpu: 0.0.40
codegen_flags: <defaults>
</compile_context>

<pallas_src>
import functools

import jax
import jax.numpy as jnp
from jax.experimental import pallas as pl
from jax.experimental.pallas import tpu as pltpu


def _round_up(x: int, m: int) -> int:
    return ((x + m - 1) // m) * m


# ----------------------------- Pallas kernel -------------------------------

def _label_smoothing_kernel(pred_ref, tgt_ref, loss_ref, *, smoothing, num_classes):
    """Per-row label-smoothed cross entropy for one (tm, C) tile.

    loss[r] = sum_c -true_dist[r, c] * log_softmax(pred)[r, c]
    true_dist = smoothing / (num_classes - 1) everywhere, (1 - smoothing) at
    the target column.  Expanded algebraically so neither true_dist nor the
    full log_softmax tensor is materialized.
    """
    logits = pred_ref[...].astype(jnp.float32)                    # (tm, C)
    n_cols = logits.shape[-1]

    # stable log-softmax pieces along the class (lane) axis
    row_max = jnp.max(logits, axis=-1, keepdims=True)             # (tm, 1)
    shifted = logits - row_max                                    # (tm, C)
    sumexp = jnp.sum(jnp.exp(shifted), axis=-1)                   # (tm,)
    lse = jnp.log(sumexp)                                         # (tm,)
    sum_shifted = jnp.sum(shifted, axis=-1)                       # (tm,)

    # shifted logit at the target column (replaces torch scatter_):
    tgt = tgt_ref[...]                                            # (tm, 1) int32
    col = jax.lax.broadcasted_iota(jnp.int32, shifted.shape, 1)   # (tm, C)
    shifted_tgt = jnp.sum(
        jnp.where(col == tgt, shifted, 0.0), axis=-1)             # (tm,)

    off = jnp.float32(smoothing / (num_classes - 1))
    on = jnp.float32(1.0 - smoothing)

    # loss = -off * sum_c lsm - (on - off) * lsm[target]
    #      = -off * (sum_shifted - C*lse) - (on - off) * (shifted_tgt - lse)
    loss = (-off * (sum_shifted - jnp.float32(n_cols) * lse)
            - (on - off) * (shifted_tgt - lse))                   # (tm,)

    # lane-dense store: one (1, 1, tm) row per tile
    loss_ref[...] = loss[None, None, :]


# ------------------------------ Wrapper ------------------------------------

def _choose_tile_and_vmem(B: int, C: int):
    """Pick the batch tile size and an explicit VMEM limit, per generation."""
    try:
        vmem_cap = int(pltpu.get_tpu_info().vmem_capacity_bytes)
    except Exception:
        vmem_cap = 64 * 1024 * 1024  # assume the smallest (v7x per-TC)
    # Leave headroom for Mosaic internal scratch; never ask for more than the
    # smallest physical VMEM minus slack.
    vmem_limit = max(32 * 1024 * 1024, min(int(vmem_cap * 0.7), 100 * 1024 * 1024))

    # Pred-block budget: double-buffered input + a few (tm, C) f32 temporaries
    # must fit inside vmem_limit; ~8 MiB blocks sit on the measured roofline
    # sweet spot.
    block_budget = min(8 * 1024 * 1024, vmem_limit // 6)
    bytes_per_row = max(C * 4, 1)                 # f32 compute width
    tm = block_budget // bytes_per_row
    tm = max(8, min(2048, (tm // 8) * 8))
    tm = min(tm, _round_up(B, 8))

    # v7x megacore only helps with >= 2 batch tiles to shard across its 2 TCs.
    if pl.cdiv(B, tm) < 2 and tm > 8:
        tm = max(8, _round_up(tm // 2, 8) if (tm // 2) % 8 == 0 else ((tm // 2 + 7) // 8) * 8)

    return tm, vmem_limit


def _per_row_losses(pred, target, num_classes, smoothing):
    B, C = pred.shape
    tm, vmem_limit = _choose_tile_and_vmem(B, C)
    num_tiles = pl.cdiv(B, tm)

    # TODO(synk): for vocab-scale num_classes, also tile the class axis
    # (grid=(batch_tiles, class_tiles), class axis last + "arbitrary") with
    # flash-softmax style running max / sum-exp / sum(shifted) / target-logit
    # accumulators, finalizing under pl.when on the last class tile.

    tgt2d = target.astype(jnp.int32).reshape(B, 1)

    kernel = functools.partial(
        _label_smoothing_kernel,
        smoothing=float(smoothing),
        num_classes=int(num_classes),
    )

    losses = pl.pallas_call(
        kernel,
        out_shape=jax.ShapeDtypeStruct((num_tiles, 1, tm), jnp.float32),
        grid=(num_tiles,),
        in_specs=[
            pl.BlockSpec((tm, C), lambda i: (i, 0)),     # pred tile (ragged last)
            pl.BlockSpec((tm, 1), lambda i: (i, 0)),     # target column
        ],
        out_specs=pl.BlockSpec((1, 1, tm), lambda i: (i, 0, 0)),  # lane-dense row
        compiler_params=pltpu.CompilerParams(
            dimension_semantics=("parallel",),           # megacore-shardable
            vmem_limit_bytes=vmem_limit,
        ),
    )(pred, tgt2d)

    # Rows >= B came from the ragged last tile (unspecified inputs); slice
    # them off BEFORE the batch mean.
    return losses.reshape(-1)[:B]


class LabelSmoothingLoss:
    """JAX/Pallas re-implementation of the PyTorch LabelSmoothingLoss."""

    def __init__(self, num_classes, smoothing=0.1):
        self.num_classes = num_classes
        self.smoothing = smoothing

    def __call__(self, pred, target):
        per_row = _per_row_losses(pred, target, self.num_classes, self.smoothing)
        return jnp.mean(per_row)


# ----------------------------- Reference ------------------------------------

def _ref_loss(pred, target, num_classes, smoothing):
    lsm = jax.nn.log_softmax(pred.astype(jnp.float32), axis=1)
    off = smoothing / (num_classes - 1)
    true_dist = jnp.full_like(lsm, off)
    true_dist = true_dist.at[jnp.arange(pred.shape[0]), target].set(1.0 - smoothing)
    return jnp.mean(jnp.sum(-true_dist * lsm, axis=1))


# ------------------------------- Main ---------------------------------------

if __name__ == "__main__":
    key = jax.random.PRNGKey(0)
    k1, k2, k3, k4 = jax.random.split(key, 4)

    # Case 1: lane-aligned class count
    B, C = 32, 128
    pred = jax.random.normal(k1, (B, C), jnp.float32)
    target = jax.random.randint(k2, (B,), 0, C, jnp.int32)
    loss_mod = LabelSmoothingLoss(C, smoothing=0.1)
    out = jax.block_until_ready(loss_mod(pred, target))
    ref = _ref_loss(pred, target, C, 0.1)
    assert jnp.allclose(out, ref, atol=1e-5, rtol=1e-5), (out, ref)

    # Case 2: ragged shapes (B not a multiple of 8, C not a multiple of 128)
    B2, C2 = 10, 37
    pred2 = jax.random.normal(k3, (B2, C2), jnp.float32)
    target2 = jax.random.randint(k4, (B2,), 0, C2, jnp.int32)
    loss_mod2 = LabelSmoothingLoss(C2, smoothing=0.2)
    out2 = jax.block_until_ready(loss_mod2(pred2, target2))
    ref2 = _ref_loss(pred2, target2, C2, 0.2)
    assert jnp.allclose(out2, ref2, atol=1e-5, rtol=1e-5), (out2, ref2)

    print("KERNEL_OK")
</pallas_src>

<mosaic_0001>
module attributes {stable_mosaic.version = 11 : i64} {
  func.func @_label_smoothing_kernel(%arg0: i32, %arg1: memref<16x128xf32, #tpu.memory_space<vmem>>, %arg2: memref<16x1xi32, #tpu.memory_space<vmem>>, %arg3: memref<1x1x16xf32, #tpu.memory_space<vmem>>) attributes {dimension_semantics = [#tpu.dimension_semantics<parallel>], iteration_bounds = array<i64: 2>, scalar_prefetch = 0 : i64, scratch_operands = 0 : i64, tpu.core_type = #tpu.core_type<tc>, window_params = [{transform_indices = @transform_0, window_bounds = array<i64: 16, 128>}, {transform_indices = @transform_1, window_bounds = array<i64: 16, 1>}, {transform_indices = @transform_2, window_bounds = array<i64: 1, 1, 16>}]} {
    %c0 = arith.constant 0 : index
    %c0_0 = arith.constant 0 : index
    %0 = vector.load %arg1[%c0, %c0_0] : memref<16x128xf32, #tpu.memory_space<vmem>>, vector<16x128xf32>
    %cst = arith.constant dense<0xFF800000> : vector<16xf32>
    %1 = vector.multi_reduction <maximumf>, %0, %cst [1] : vector<16x128xf32> to vector<16xf32>
    %2 = vector.shape_cast %1 : vector<16xf32> to vector<16x1xf32>
    %3 = vector.broadcast %2 : vector<16x1xf32> to vector<16x128xf32>
    %4 = arith.subf %0, %3 : vector<16x128xf32>
    %5 = math.exp %4 : vector<16x128xf32>
    %cst_1 = arith.constant dense<0.000000e+00> : vector<16xf32>
    %6 = vector.multi_reduction <add>, %5, %cst_1 [1] : vector<16x128xf32> to vector<16xf32>
    %7 = math.log %6 : vector<16xf32>
    %cst_2 = arith.constant dense<0.000000e+00> : vector<16xf32>
    %8 = vector.multi_reduction <add>, %4, %cst_2 [1] : vector<16x128xf32> to vector<16xf32>
    %c0_3 = arith.constant 0 : index
    %c0_4 = arith.constant 0 : index
    %9 = vector.load %arg2[%c0_3, %c0_4] : memref<16x1xi32, #tpu.memory_space<vmem>>, vector<16x1xi32>
    %10 = tpu.iota {dimensions = array<i32: 1>} : vector<16x128xi32>
    %11 = vector.broadcast %9 : vector<16x1xi32> to vector<16x128xi32>
    %12 = arith.cmpi eq, %10, %11 : vector<16x128xi32>
    %cst_5 = arith.constant 0.000000e+00 : f32
    %13 = vector.broadcast %cst_5 : f32 to vector<16x128xf32>
    %14 = arith.select %12, %4, %13 : vector<16x128xi1>, vector<16x128xf32>
    %cst_6 = arith.constant dense<0.000000e+00> : vector<16xf32>
    %15 = vector.multi_reduction <add>, %14, %cst_6 [1] : vector<16x128xf32> to vector<16xf32>
    %cst_7 = arith.constant 0.000000e+00 : f32
    %cst_8 = arith.constant 7.87401571E-4 : f32
    %16 = arith.subf %cst_7, %cst_8 : f32
    %cst_9 = arith.constant 1.280000e+02 : f32
    %17 = vector.broadcast %cst_9 : f32 to vector<16xf32>
    %18 = arith.mulf %17, %7 : vector<16xf32>
    %19 = arith.subf %8, %18 : vector<16xf32>
    %20 = vector.broadcast %16 : f32 to vector<16xf32>
    %21 = arith.mulf %20, %19 : vector<16xf32>
    %cst_10 = arith.constant 0.899999976 : f32
    %cst_11 = arith.constant 7.87401571E-4 : f32
    %22 = arith.subf %cst_10, %cst_11 : f32
    %23 = arith.subf %15, %7 : vector<16xf32>
    %24 = vector.broadcast %22 : f32 to vector<16xf32>
    %25 = arith.mulf %24, %23 : vector<16xf32>
    %26 = arith.subf %21, %25 : vector<16xf32>
    %27 = vector.shape_cast %26 : vector<16xf32> to vector<1x1x16xf32>
    %c0_12 = arith.constant 0 : index
    %c0_13 = arith.constant 0 : index
    %c0_14 = arith.constant 0 : index
    %28 = vector.load %arg3[%c0_12, %c0_13, %c0_14] : memref<1x1x16xf32, #tpu.memory_space<vmem>>, vector<1x1x16xf32>
    tpu.vector_store %arg3[%c0_12, %c0_13, %c0_14], %27 {strides = array<i32>} : memref<1x1x16xf32, #tpu.memory_space<vmem>>, vector<1x1x16xf32>,
    return
  }
  func.func @transform_0(%arg0: i32) -> (i32, i32) {
    %c0_i32 = arith.constant 0 : i32
    %c0_i32_0 = arith.constant 0 : i32
    return %arg0, %c0_i32 : i32, i32
  }
  func.func @transform_1(%arg0: i32) -> (i32, i32) {
    %c0_i32 = arith.constant 0 : i32
    %c0_i32_0 = arith.constant 0 : i32
    return %arg0, %c0_i32 : i32, i32
  }
  func.func @transform_2(%arg0: i32) -> (i32, i32, i32) {
    %c0_i32 = arith.constant 0 : i32
    %c0_i32_0 = arith.constant 0 : i32
    %c0_i32_1 = arith.constant 0 : i32
    return %arg0, %c0_i32, %c0_i32_0 : i32, i32, i32
  }
}

</mosaic_0001>

<llo_original>
// kernel: tpu_custom_call.1
$region0: #{tpu_custom_call.1}
  #allocation0 [shape = 'u32[]', space=smem, size = 0x4, offset = 0x4, fixed_abs, tag = 'smem constant byte address 0x4 - core index']
  #allocation1 [shape = 'u32[144,128]{1,0:T(1,128)}', space=vmem, size = 0x12000, scoped, tag = 'internal scratch']
  %s0 = inlined_call_operand.vmem [shape: f32[32,128], index: 0, kind: input, shape index: {}]
  %s1 = inlined_call_operand.vmem [shape: s32[32,1], index: 1, kind: input, shape index: {}]
  %s2 = inlined_call_operand.hbm [shape: f32[2,1,16], index: 2, kind: output, shape index: {}]
  %s3 = sld [smem:[#allocation0]]
  $region41: #{tpu_custom_call.1} parent=0
    _
  %s5 = ssub.s32 1, %s3
  %s6 = scalar_select 0, %s5, %s3
  $region1: #{tpu_custom_call.1} parent=0
    #allocation2 [shape = 'u8[1024]{0}', space=vmem, size = 0x400, scoped, tag = 'output window, operand 0']
    #allocation3 [shape = 's32[2]{0}', space=sflag, size = 0x8, scoped, tag = 'scoped memory for tpu_custom_call.1']
    %7 = vsyncpa [#allocation3], 0
    %s8 = scalar_lea.sflag [#allocation3], 1
    %9 = vsyncpa %s8, 0
    loop: start=0, step=1, limit=4
    $region2: #{tpu_custom_call.1} parent=1 // loop_pre_header
      _
    $region3: #{tpu_custom_call.1} parent=1 // loop_header
      %s11 = sphi 0, %s15
      %p12 = scmp.ge.s32.totalorder %s11, 4
      %s21 = sphi 0, %s23
      %s24 = sphi 0, %s21
      %s25 = sphi 0, %s24
      %s41 = sphi 0, %s25
      %s47 = sphi 0, %s49
      %s50 = sphi 0, %s47
      %s51 = sphi 0, %s50
      %s67 = sphi 0, %s51
      %s73 = sphi 0, %s75
      %s76 = sphi 0, %s73
      %s77 = sphi 0, %s76
      %s93 = sphi 0, %s77
    $region4: #{tpu_custom_call.1} parent=1 // loop_header_branch
      %14 = sbr.rel (%p12) target = $region8
    $region5: #{tpu_custom_call.1} parent=1 // loop_body
      %s16 = ssub.s32 %s11, 1
      %s17 = ssub.s32 %s11, 2
      %s18 = sadd.s32 %s11, 1
      %s19 = ssub.s32 %s11, %s18
      %p20 = scmp.eq.s32.totalorder %s19, 0
      %s22 = sadd.s32 %s21, 1
      %s23 = scalar_select %p20, %s21, %s22
      %p26 = pneg %p20
      %p27 = scmp.eq.s32.totalorder %s11, 1
      %p28 = por %p26, %p27
      %p29 = scmp.ne.s32.totalorder %s21, %s24
      %p30 = scmp.eq.s32.totalorder %s11, 0
      %p31 = por %p29, %p30
      %p32 = scmp.ne.s32.totalorder %s21, %s24
      %p33 = scmp.eq.s32.totalorder %s16, 1
      %p34 = por %p32, %p33
      %p35 = scmp.ne.s32.totalorder %s24, %s25
      %p36 = scmp.eq.s32.totalorder %s16, 0
      %p37 = por %p35, %p36
      %p38 = scmp.ne.s32.totalorder %s24, %s25
      %p39 = scmp.eq.s32.totalorder %s17, 1
      %p40 = por %p38, %p39
      %p42 = scmp.ne.s32.totalorder %s25, %s41
      %p43 = scmp.eq.s32.totalorder %s17, 0
      %p44 = por %p42, %p43
      %s45 = ssub.s32 %s11, %s18
      %p46 = scmp.eq.s32.totalorder %s45, 0
      %s48 = sadd.s32 %s47, 1
      %s49 = scalar_select %p46, %s47, %s48
      %p52 = pneg %p46
      %p53 = scmp.eq.s32.totalorder %s11, 1
      %p54 = por %p52, %p53
      %p55 = scmp.ne.s32.totalorder %s47, %s50
      %p56 = scmp.eq.s32.totalorder %s11, 0
      %p57 = por %p55, %p56
      %p58 = scmp.ne.s32.totalorder %s47, %s50
      %p59 = scmp.eq.s32.totalorder %s16, 1
      %p60 = por %p58, %p59
      %p61 = scmp.ne.s32.totalorder %s50, %s51
      %p62 = scmp.eq.s32.totalorder %s16, 0
      %p63 = por %p61, %p62
      %p64 = scmp.ne.s32.totalorder %s50, %s51
      %p65 = scmp.eq.s32.totalorder %s17, 1
      %p66 = por %p64, %p65
      %p68 = scmp.ne.s32.totalorder %s51, %s67
      %p69 = scmp.eq.s32.totalorder %s17, 0
      %p70 = por %p68, %p69
      %s71 = ssub.s32 %s11, %s18
      %p72 = scmp.eq.s32.totalorder %s71, 0
      %s74 = sadd.s32 %s73, 1
      %s75 = scalar_select %p72, %s73, %s74
      %p78 = pneg %p72
      %p79 = scmp.eq.s32.totalorder %s11, 1
      %p80 = por %p78, %p79
      %p81 = scmp.ne.s32.totalorder %s73, %s76
      %p82 = scmp.eq.s32.totalorder %s11, 0
      %p83 = por %p81, %p82
      %p84 = scmp.ne.s32.totalorder %s73, %s76
      %p85 = scmp.eq.s32.totalorder %s16, 1
      %p86 = por %p84, %p85
      %p87 = scmp.ne.s32.totalorder %s76, %s77
      %p88 = scmp.eq.s32.totalorder %s16, 0
      %p89 = por %p87, %p88
      %p90 = scmp.ne.s32.totalorder %s76, %s77
      %p91 = scmp.eq.s32.totalorder %s17, 1
      %p92 = por %p90, %p91
      %p94 = scmp.ne.s32.totalorder %s77, %s93
      %p95 = scmp.eq.s32.totalorder %s17, 0
      %p96 = por %p94, %p95
      %p97 = scmp.le.s32.totalorder 1, %s11
      %p98 = scmp.lt.s32.totalorder %s11, 3
      %p99 = pnand %p97, %p98
      %p100 = pneg %p99
      // Predicated region
      $region9: #{tpu_custom_call.1} parent=5 // pred_check
        _
      $region10: #{tpu_custom_call.1} parent=5 // pred_check_branch
        %102 = sbr.rel (%p99) target = $region12
      $region11: #{tpu_custom_call.1} parent=5 // pred_region
        %s103 = ssub.s32 %s11, 1
      $region12: #{tpu_custom_call.1} parent=5 // pred_fallthru
        _
      %p104 = scmp.lt.s32.totalorder %s11, 2
      // Predicated region
      $region13: #{tpu_custom_call.1} parent=5 // pred_check
        %p105 = pneg %p104
      $region14: #{tpu_custom_call.1} parent=5 // pred_check_branch
        %107 = sbr.rel (%p105) target = $region16
      $region15: #{tpu_custom_call.1} parent=5 // pred_region
        // Predicated region
        $region17: #{tpu_custom_call.1} parent=15 // pred_check
          %p108 = pneg %p31
        $region18: #{tpu_custom_call.1} parent=15 // pred_check_branch
          %110 = sbr.rel (%p108) target = $region20
        $region19: #{tpu_custom_call.1} parent=15 // pred_region
          %s111 = smul.u32 2, %s11
          %p112 = scmp.lt.s32.totalorder %s111, 3
          %s113 = scalar_select %p112, %s111, 3
          %s114 = smul.addr %s113, 8
          %s115 = scalar_lea.vmem %s0, %s114
          %s116 = smul.u32 2, %s11
        $region20: #{tpu_custom_call.1} parent=15 // pred_fallthru
          _
        // Predicated region
        $region21: #{tpu_custom_call.1} parent=15 // pred_check
          %p117 = pneg %p57
        $region22: #{tpu_custom_call.1} parent=15 // pred_check_branch
          %119 = sbr.rel (%p117) target = $region24
        $region23: #{tpu_custom_call.1} parent=15 // pred_region
          %s120 = smul.u32 2, %s11
          %p121 = scmp.lt.s32.totalorder %s120, 3
          %s122 = scalar_select %p121, %s120, 3
          %s123 = smul.addr %s122, 8
          %s124 = scalar_lea.vmem %s1, %s123
          %s125 = smul.u32 2, %s11
        $region24: #{tpu_custom_call.1} parent=15 // pred_fallthru
          _
      $region16: #{tpu_custom_call.1} parent=5 // pred_fallthru
        _
      %p126 = scmp.le.s32.totalorder 1, %s11
      %p127 = scmp.lt.s32.totalorder %s11, 3
      %p128 = pnand %p126, %p127
      %p129 = pneg %p128
      // Predicated region
      $region25: #{tpu_custom_call.1} parent=5 // pred_check
        _
      $region26: #{tpu_custom_call.1} parent=5 // pred_check_branch
        %131 = sbr.rel (%p128) target = $region28
      $region27: #{tpu_custom_call.1} parent=5 // pred_region
        %s132 = ssub.s32 %s11, 1
        %s133 = smul.u32 2, %s16
        %p134 = scmp.lt.s32.totalorder %s133, 3
        %s135 = scalar_select %p134, %s133, 3
        %s136 = smul.addr %s135, 8
        %s137 = scalar_lea.vmem %s0, %s136
        %p138 = pneg %p37
        %p139 = pneg %p34
        %s140 = smul.u32 2, %s16
        %p141 = scmp.lt.s32.totalorder %s140, 3
        %s142 = scalar_select %p141, %s140, 3
        %s143 = smul.addr %s142, 8
        %s144 = scalar_lea.vmem %s1, %s143
        %p145 = pneg %p63
        %p146 = pneg %p60
        %p147 = pneg %p89
        %p148 = pneg %p86
        %s149 = sand.u32 %s76, 1
        %s150 = scalar_lea.sflag [#allocation3], %s149
        %s151 = sand.u32 %s76, 1
        %s152 = scalar_lea.vmem [#allocation2], %s151
        %s153 = smul.u32 2, %s16
        %p154 = scmp.lt.s32.totalorder %s153, 3
        %s155 = scalar_select %p154, %s153, 3
        %s156 = smul.addr %s155, 8
        %s157 = scalar_lea.vmem %s0, %s156
        %s158 = smul.u32 2, %s16
        %s159 = smul.u32 2, %s16
        %p160 = scmp.lt.s32.totalorder %s159, 3
        %s161 = scalar_select %p160, %s159, 3
        %s162 = smul.addr %s161, 8
        %s163 = scalar_lea.vmem %s1, %s162
        %s164 = smul.u32 2, %s16
        %v165 = vld [vmem:[%s157] sm:$0xff]
        %v166 = vld [vmem:[%s157 + $0x8] sm:$0xff]
        %167 = vmax.xlane.f32.xlu0 %v165
        %v168 = vpop.xlane.xlu0 %167
        %169 = vmax.xlane.f32.xlu0 %v166
        %v170 = vpop.xlane.xlu0 %169
        %v171 = vsub.f32 %v165, %v168
        %v172 = vsub.f32 %v166, %v170
        %v173 = vmul.f32 %v171, 1.442695
        %v174 = vpow.pop %v173
        %v175 = vmul.f32 %v172, 1.442695
        %v176 = vpow.pop %v175
        %177 = vadd.xlane.f32.xlu0 %v174
        %v178 = vpop.xlane.xlu0 %177
        %179 = vadd.xlane.f32.xlu0 %v176
        %v180 = vpop.xlane.xlu0 %179
        %v181 = vlog2.pop %v178
        %v182 = vmul.f32 %v181, 0.6931472
        %v183 = vlog2.pop %v180
        %v184 = vmul.f32 %v183, 0.6931472
        %185 = vadd.xlane.f32.xlu0 %v171
        %v186 = vpop.xlane.xlu0 %185
        %187 = vadd.xlane.f32.xlu0 %v172
        %v188 = vpop.xlane.xlu0 %187
        %v189 = vld [vmem:[%s163] sm:$0xff]
        %v190 = vld [vmem:[%s163 + $0x8] sm:$0xff]
        %v191 = vlaneseq
        %v192 = vand.u32 %v191, 127
        %193 = vset.pattern.permute.xlu0 0
        %194 = vperm.xlu0 %193, %v189
        %v195 = vpop.permute.xlu0 %194
        %196 = vset.pattern.permute.xlu0 0
        %197 = vperm.xlu0 %196, %v190
        %v198 = vpop.permute.xlu0 %197
        %vm199 = vcmp.eq.s32.totalorder %v192, %v195
        %vm200 = vcmp.eq.s32.totalorder %v192, %v198
        %v201 = vsel %vm199, %v171, 0.0
        %v202 = vsel %vm200, %v172, 0.0
        %203 = vadd.xlane.f32.xlu0 %v201
        %v204 = vpop.xlane.xlu0 %203
        %205 = vadd.xlane.f32.xlu0 %v202
        %v206 = vpop.xlane.xlu0 %205
        %v207 = vmul.f32 %v182, 128.0
        %v208 = vmul.f32 %v184, 128.0
        %v209 = vsub.f32 %v186, %v207
        %v210 = vsub.f32 %v188, %v208
        %v211 = vmul.f32 %v209, -0.0007874016
        %v212 = vmul.f32 %v210, -0.0007874016
        %v213 = vsub.f32 %v204, %v182
        %v214 = vsub.f32 %v206, %v184
        %v215 = vmul.f32 %v213, 0.8992126
        %v216 = vmul.f32 %v214, 0.8992126
        %v217 = vsub.f32 %v211, %v215
        %v218 = vsub.f32 %v212, %v216
        %v221 = vlaneseq
        %v222 = vshrl.u32 %v221, 7
        %v223 = vsub.s32 %v192, %v222
        %v224 = vrot.slane %v217, %v223
        %v225 = vadd.s32 %v192, 4294967288
        %v226 = vlaneseq
        %v227 = vshrl.u32 %v226, 7
        %v228 = vsub.s32 %v225, %v227
        %v229 = vrot.slane %v218, %v228
        %vm230 = vcmask 130112
        %v231 = vsel %vm230, %v229, %v224
        %vm233 = vcmask 122880
        %234 = vst.msk [vmem:[%s152] sm:$0x1] %vm233, %v231
        %s235 = sand.u32 %s76, 1
        %s236 = scalar_lea.sflag [#allocation3], %s235
        %s237 = sand.u32 %s76, 1
        %s238 = scalar_lea.vmem [#allocation2], %s237
        // Predicated region
        $region29: #{tpu_custom_call.1} parent=27 // pred_check
          %p239 = pneg %p86
        $region30: #{tpu_custom_call.1} parent=27 // pred_check_branch
          %241 = sbr.rel (%p239) target = $region32
        $region31: #{tpu_custom_call.1} parent=27 // pred_region
          %s243 = ssub.s32 16, 16
          %244 = vsyncadd %s236, %s243
          %s245 = smul.addr %s16, 16
          %s246 = scalar_lea.hbm %s2, %s245
          %s248 = sshll.u32 %s238, 4
          %s249 = int_to_ptr.vmem [resolvable:$true] %s248
          %251 = dma.vmem_to_hbm [thread:$0]  %s249, 16, %s246, %s236
        $region32: #{tpu_custom_call.1} parent=27 // pred_fallthru
          _
      $region28: #{tpu_custom_call.1} parent=5 // pred_fallthru
        _
      %p252 = scmp.le.s32.totalorder 2, %s11
      // Predicated region
      $region33: #{tpu_custom_call.1} parent=5 // pred_check
        %p253 = pneg %p252
      $region34: #{tpu_custom_call.1} parent=5 // pred_check_branch
        %255 = sbr.rel (%p253) target = $region36
      $region35: #{tpu_custom_call.1} parent=5 // pred_region
        %s256 = ssub.s32 %s11, 2
        // Predicated region
        $region37: #{tpu_custom_call.1} parent=35 // pred_check
          %p257 = pneg %p92
        $region38: #{tpu_custom_call.1} parent=35 // pred_check_branch
          %259 = sbr.rel (%p257) target = $region40
        $region39: #{tpu_custom_call.1} parent=35 // pred_region
          %s260 = sand.u32 %s77, 1
          %s261 = scalar_lea.sflag [#allocation3], %s260
          %s262 = sand.u32 %s77, 1
          %s263 = scalar_lea.vmem [#allocation2], %s262
          %264 = dma.done %s261, 16
        $region40: #{tpu_custom_call.1} parent=35 // pred_fallthru
          _
      $region36: #{tpu_custom_call.1} parent=5 // pred_fallthru
        _
    $region6: #{tpu_custom_call.1} parent=1 // loop_footer
      %s15 = sadd.s32 1, %s11
    $region7: #{tpu_custom_call.1} parent=1 // loop_footer_branch
      %10 = sbr.rel target = $region3
    $region8: #{tpu_custom_call.1} parent=1 // loop_exit
      _
    %265 = vsyncpa [#allocation3], 1
    %s266 = scalar_lea.sflag [#allocation3], 1
    %267 = vsyncpa %s266, 1

</llo_original>
